<compile_context>
chip_gen: v7x
topology: tpu7x:2x2x1
jax: 0.10.0
libtpu: 0.0.40
codegen_flags: <defaults>
</compile_context>

<pallas_src>
import functools

import jax
import jax.numpy as jnp
from jax import lax
from jax.experimental import pallas as pl
from jax.experimental.pallas import tpu as pltpu


def _round_up(x, m):
    return ((x + m - 1) // m) * m


def _gat_kernel(src_ref, edge_w_ref, out_ref, acc_ref, *, out_features):
    """Grid = (n_tiles, e_steps); e (reduction) axis is last.

    src_ref    : [1, E_T]        int32  tile-LOCAL source node id per edge (-1 = pad)
    edge_w_ref : [E_T, OUT_PAD]  f32    precomputed edge_e * edge_m; column
                                        `out_features` holds edge_e (rowsum column)
    out_ref    : [N_T, OUT_PAD]  f32    output tile (written at last e step)
    acc_ref    : [N_T, OUT_PAD]  f32    VMEM accumulator (h_prime | e_rowsum | 0s)
    """
    e_idx = pl.program_id(1)
    n_tile = out_ref.shape[0]
    e_tile = src_ref.shape[1]

    @pl.when(e_idx == 0)
    def _init():
        acc_ref[...] = jnp.zeros_like(acc_ref)

    # Segment-sum by (tile-local) source node id as a one-hot matmul on the MXU.
    local_ids = lax.broadcasted_iota(jnp.int32, (n_tile, e_tile), 0)
    onehot = (local_ids == src_ref[...]).astype(jnp.float32)        # [N_T, E_T]
    acc_ref[...] += jnp.dot(onehot, edge_w_ref[...],
                            preferred_element_type=jnp.float32)     # [N_T, OUT_PAD]

    @pl.when(e_idx == pl.num_programs(1) - 1)
    def _finalize():
        acc = acc_ref[...]
        e_rowsum = acc[:, out_features:out_features + 1]             # [N_T, 1]
        e_rowsum = jnp.where(e_rowsum == 0.0, 1e-12, e_rowsum)
        h = acc / e_rowsum                                           # exact divide
        # concat=True branch: ELU
        out_ref[...] = jnp.where(h > 0, h, jnp.exp(h) - 1.0)


def sp_graph_attention_forward(inputs, edge, edge_embed, a, a_2, alpha,
                               *, n_tile=None, e_tile=None):
    """Pallas implementation of SpGraphAttentionLayer.forward (concat=True, eval)."""
    f32 = jnp.float32
    hp = jax.lax.Precision.HIGHEST

    N, in_f = inputs.shape
    E = edge.shape[1]
    out_f = a.shape[0]

    src = edge[0].astype(jnp.int32)
    dst = edge[1].astype(jnp.int32)

    # --- Linearity hoist: project once over nodes / relations, gather per edge ---
    a_src = a[:, :in_f].astype(f32)
    a_dst = a[:, in_f:2 * in_f].astype(f32)
    a_rel = a[:, 2 * in_f:].astype(f32)
    proj_src = jnp.dot(inputs.astype(f32), a_src.T, precision=hp)        # [N, out]
    proj_dst = jnp.dot(inputs.astype(f32), a_dst.T, precision=hp)        # [N, out]
    rel_proj = jnp.dot(edge_embed.astype(f32), a_rel.T, precision=hp)    # [E, out]
    edge_m = proj_src[src] + proj_dst[dst] + rel_proj                    # [E, out]

    # --- Attention coefficients hoisted out of the kernel (single pass over E) ---
    z = jnp.dot(edge_m, a_2[0].astype(f32), precision=hp)                # [E]
    lrelu = jnp.where(z > 0, z, alpha * z)
    edge_e = jnp.exp(-lrelu)                                             # [E]
    # TODO(synk): dropout(edge_e) skipped (eval mode identity).

    # edge_w_aug: [edge_e*edge_m | edge_e]; one MXU pass yields h_prime AND e_rowsum.
    edge_w_aug = jnp.concatenate(
        [edge_e[:, None] * edge_m, edge_e[:, None]], axis=1)             # [E, out+1]

    # --- Tile sizes / lane-dense padding ---
    OUT_PAD = _round_up(out_f + 1, 128)
    N_T = n_tile if n_tile is not None else min(256, _round_up(N, 8))
    E_T = e_tile if e_tile is not None else 1024                         # mult of 128
    N_pad = _round_up(N, N_T)
    n_tiles = N_pad // N_T

    # --- CSR-style bucketing: pack each N tile's edges contiguously so every edge
    #     tile is streamed exactly once (grid e axis iterates within the bucket). ---
    tile_id = src // N_T                                                 # [E]
    counts = jnp.bincount(tile_id, length=n_tiles)
    max_edges = int(jnp.max(counts))                                     # eager wrapper
    bucket = _round_up(max(max_edges, 1), E_T)
    e_steps = bucket // E_T
    total_slots = n_tiles * bucket

    order = jnp.argsort(tile_id)                                         # stable
    tile_sorted = tile_id[order]
    tile_start = jnp.concatenate(
        [jnp.zeros((1,), jnp.int32),
         jnp.cumsum(counts)[:-1].astype(jnp.int32)])
    rank = jnp.arange(E, dtype=jnp.int32) - tile_start[tile_sorted]
    dest = tile_sorted * bucket + rank                                   # [E]

    edge_w_full = jnp.pad(edge_w_aug.astype(f32),
                          ((0, 0), (0, OUT_PAD - (out_f + 1))))          # [E, OUT_PAD]
    edge_w_pad = jnp.zeros((total_slots, OUT_PAD), f32).at[dest].set(edge_w_full[order])

    # Tile-local src ids; padded slots get -1 so they never match any node row.
    src_local = (src - tile_id * N_T).astype(jnp.int32)
    src_pad = jnp.full((total_slots,), -1, jnp.int32).at[dest].set(src_local[order])
    src_pad = src_pad.reshape(1, total_slots)

    grid = (n_tiles, e_steps)

    out = pl.pallas_call(
        functools.partial(_gat_kernel, out_features=out_f),
        out_shape=jax.ShapeDtypeStruct((N_pad, OUT_PAD), f32),
        grid_spec=pltpu.PrefetchScalarGridSpec(
            num_scalar_prefetch=0,
            grid=grid,
            in_specs=[
                pl.BlockSpec((1, E_T), lambda n, e: (0, n * e_steps + e)),        # src
                pl.BlockSpec((E_T, OUT_PAD), lambda n, e: (n * e_steps + e, 0)),  # edge_w
            ],
            out_specs=pl.BlockSpec((N_T, OUT_PAD), lambda n, e: (n, 0)),
            scratch_shapes=[pltpu.VMEM((N_T, OUT_PAD), jnp.float32)],
        ),
        compiler_params=pltpu.CompilerParams(
            dimension_semantics=("parallel", "arbitrary"),
            vmem_limit_bytes=32 << 20,
        ),
    )(src_pad, edge_w_pad)

    return out[:N, :out_f]


def _reference_forward(inputs, edge, edge_embed, a, a_2, alpha):
    """Pure-JAX reference mirroring the torch forward (eval mode)."""
    hp = jax.lax.Precision.HIGHEST
    N = inputs.shape[0]
    src = edge[0].astype(jnp.int32)
    dst = edge[1].astype(jnp.int32)
    edge_h = jnp.concatenate((inputs[src], inputs[dst], edge_embed), axis=1).T
    edge_m = jnp.dot(a, edge_h, precision=hp)                            # [out, E]
    z = jnp.dot(a_2, edge_m, precision=hp).squeeze(0)                    # [E]
    powers = -jnp.where(z > 0, z, alpha * z)
    edge_e = jnp.exp(powers)                                             # [E]
    e_rowsum = jnp.zeros((N, 1), jnp.float32).at[src, 0].add(edge_e)
    e_rowsum = jnp.where(e_rowsum == 0.0, 1e-12, e_rowsum)
    edge_w = (edge_e * edge_m).T                                         # [E, out]
    h_prime = jnp.zeros((N, a.shape[0]), jnp.float32).at[src].add(edge_w)
    h = h_prime / e_rowsum
    return jnp.where(h > 0, h, jnp.exp(h) - 1.0)


def _xavier_normal(key, shape, gain):
    fan_out, fan_in = shape
    std = gain * (2.0 / (fan_in + fan_out)) ** 0.5
    return std * jax.random.normal(key, shape, dtype=jnp.float32)


if __name__ == "__main__":
    # Small, deterministic problem; tiles chosen so the grid has multiple
    # N-tiles and E-steps (exercises accumulator init/finalize, CSR bucketing
    # with padded edge slots, and local-id one-hot matching).
    N = 24               # num_nodes
    in_features = 16
    out_features = 16
    nrela_dim = 8
    E = 300              # number of edges
    alpha = 0.2

    key = jax.random.PRNGKey(0)
    k_in, k_emb, k_a, k_a2, k_src, k_dst = jax.random.split(key, 6)

    inputs = jax.random.normal(k_in, (N, in_features), dtype=jnp.float32)
    edge_embed = jax.random.normal(k_emb, (E, nrela_dim), dtype=jnp.float32)
    edge = jnp.stack(
        [jax.random.randint(k_src, (E,), 0, N),
         jax.random.randint(k_dst, (E,), 0, N)], axis=0
    ).astype(jnp.int32)                                                  # [2, E]

    # Parameters (xavier_normal, gain=1.414), deterministic init.
    a = _xavier_normal(k_a, (out_features, 2 * in_features + nrela_dim), 1.414)
    a_2 = _xavier_normal(k_a2, (1, out_features), 1.414)

    out = sp_graph_attention_forward(inputs, edge, edge_embed, a, a_2, alpha,
                                     n_tile=16, e_tile=128)
    out = jax.block_until_ready(out)

    ref = _reference_forward(inputs, edge, edge_embed, a, a_2, alpha)
    assert out.shape == (N, out_features)
    # Exact division + f32 MXU operands: only fp accumulation-order differences remain.
    assert jnp.allclose(out, ref, atol=2e-3, rtol=2e-3), \
        float(jnp.max(jnp.abs(out - ref)))

    print("KERNEL_OK")
</pallas_src>

<mosaic_0001>
module attributes {stable_mosaic.version = 11 : i64} {
  func.func @_gat_kernel(%arg0: i32, %arg1: i32, %arg2: memref<1x128xi32, #tpu.memory_space<vmem>>, %arg3: memref<128x128xf32, #tpu.memory_space<vmem>>, %arg4: memref<16x128xf32, #tpu.memory_space<vmem>>, %arg5: memref<16x128xf32, #tpu.memory_space<vmem>>) attributes {dimension_semantics = [#tpu.dimension_semantics<parallel>, #tpu.dimension_semantics<arbitrary>], iteration_bounds = array<i64: 2, 2>, scalar_prefetch = 0 : i64, scratch_operands = 1 : i64, tpu.core_type = #tpu.core_type<tc>, window_params = [{transform_indices = @transform_0, window_bounds = array<i64: 1, 128>}, {transform_indices = @transform_1, window_bounds = array<i64: 128, 128>}, {transform_indices = @transform_2, window_bounds = array<i64: 16, 128>}]} {
    %c0_i32 = arith.constant 0 : i32
    %0 = arith.cmpi eq, %arg1, %c0_i32 : i32
    %1 = arith.extui %0 : i1 to i32
    %c0_i32_0 = arith.constant 0 : i32
    %2 = arith.cmpi ne, %1, %c0_i32_0 : i32
    scf.if %2 {
      %cst_9 = arith.constant 0.000000e+00 : f32
      %17 = vector.broadcast %cst_9 : f32 to vector<16x128xf32>
      %c0_10 = arith.constant 0 : index
      %c0_11 = arith.constant 0 : index
      %18 = vector.load %arg5[%c0_10, %c0_11] : memref<16x128xf32, #tpu.memory_space<vmem>>, vector<16x128xf32>
      tpu.vector_store %arg5[%c0_10, %c0_11], %17 {strides = array<i32>} : memref<16x128xf32, #tpu.memory_space<vmem>>, vector<16x128xf32>,
    } else {
    }
    %3 = tpu.iota {dimensions = array<i32: 0>} : vector<16x128xi32>
    %c0 = arith.constant 0 : index
    %c0_1 = arith.constant 0 : index
    %4 = vector.load %arg2[%c0, %c0_1] : memref<1x128xi32, #tpu.memory_space<vmem>>, vector<1x128xi32>
    %5 = vector.broadcast %4 : vector<1x128xi32> to vector<16x128xi32>
    %6 = arith.cmpi eq, %3, %5 : vector<16x128xi32>
    %7 = arith.extui %6 : vector<16x128xi1> to vector<16x128xi32>
    %8 = arith.sitofp %7 : vector<16x128xi32> to vector<16x128xf32>
    %c0_2 = arith.constant 0 : index
    %c0_3 = arith.constant 0 : index
    %9 = vector.load %arg5[%c0_2, %c0_3] : memref<16x128xf32, #tpu.memory_space<vmem>>, vector<16x128xf32>
    %c0_4 = arith.constant 0 : index
    %c0_5 = arith.constant 0 : index
    %10 = vector.load %arg3[%c0_4, %c0_5] : memref<128x128xf32, #tpu.memory_space<vmem>>, vector<128x128xf32>
    %cst = arith.constant dense<0.000000e+00> : vector<16x128xf32>
    %11 = tpu.matmul %8, %10, %cst {dimension_numbers = #tpu.dot_dimension_numbers<[1], [0], [0], [1], [0, 0, 1, 1], [], []>} : vector<16x128xf32>, vector<128x128xf32>, vector<16x128xf32> -> vector<16x128xf32>
    %12 = arith.addf %9, %11 : vector<16x128xf32>
    %c0_6 = arith.constant 0 : index
    %c0_7 = arith.constant 0 : index
    %13 = vector.load %arg5[%c0_6, %c0_7] : memref<16x128xf32, #tpu.memory_space<vmem>>, vector<16x128xf32>
    tpu.vector_store %arg5[%c0_6, %c0_7], %12 {strides = array<i32>} : memref<16x128xf32, #tpu.memory_space<vmem>>, vector<16x128xf32>,
    %c1_i32 = arith.constant 1 : i32
    %14 = arith.cmpi eq, %arg1, %c1_i32 : i32
    %15 = arith.extui %14 : i1 to i32
    %c0_i32_8 = arith.constant 0 : i32
    %16 = arith.cmpi ne, %15, %c0_i32_8 : i32
    scf.if %16 {
      %c0_9 = arith.constant 0 : index
      %c0_10 = arith.constant 0 : index
      %17 = vector.load %arg5[%c0_9, %c0_10] : memref<16x128xf32, #tpu.memory_space<vmem>>, vector<16x128xf32>
      %18 = vector.extract_strided_slice %17 {offsets = [0, 16], sizes = [16, 1], strides = [1, 1]} : vector<16x128xf32> to vector<16x1xf32>
      %cst_11 = arith.constant 0.000000e+00 : f32
      %19 = vector.broadcast %cst_11 : f32 to vector<16x1xf32>
      %20 = arith.cmpf oeq, %18, %19 : vector<16x1xf32>
      %cst_12 = arith.constant 9.99999996E-13 : f32
      %21 = vector.broadcast %cst_12 : f32 to vector<16x1xf32>
      %22 = arith.select %20, %21, %18 : vector<16x1xi1>, vector<16x1xf32>
      %23 = vector.broadcast %22 : vector<16x1xf32> to vector<16x128xf32>
      %24 = arith.divf %17, %23 : vector<16x128xf32>
      %cst_13 = arith.constant 0.000000e+00 : f32
      %25 = vector.broadcast %cst_13 : f32 to vector<16x128xf32>
      %26 = arith.cmpf ogt, %24, %25 : vector<16x128xf32>
      %27 = math.exp %24 : vector<16x128xf32>
      %cst_14 = arith.constant 1.000000e+00 : f32
      %28 = vector.broadcast %cst_14 : f32 to vector<16x128xf32>
      %29 = arith.subf %27, %28 : vector<16x128xf32>
      %30 = arith.select %26, %24, %29 : vector<16x128xi1>, vector<16x128xf32>
      %c0_15 = arith.constant 0 : index
      %c0_16 = arith.constant 0 : index
      %31 = vector.load %arg4[%c0_15, %c0_16] : memref<16x128xf32, #tpu.memory_space<vmem>>, vector<16x128xf32>
      tpu.vector_store %arg4[%c0_15, %c0_16], %30 {strides = array<i32>} : memref<16x128xf32, #tpu.memory_space<vmem>>, vector<16x128xf32>,
    } else {
    }
    return
  }
  func.func @transform_0(%arg0: i32, %arg1: i32) -> (i32, i32) {
    %c2_i32 = arith.constant 2 : i32
    %0 = arith.muli %arg0, %c2_i32 : i32
    %1 = arith.addi %0, %arg1 : i32
    %c0_i32 = arith.constant 0 : i32
    %c0_i32_0 = arith.constant 0 : i32
    return %c0_i32, %1 : i32, i32
  }
  func.func @transform_1(%arg0: i32, %arg1: i32) -> (i32, i32) {
    %c2_i32 = arith.constant 2 : i32
    %0 = arith.muli %arg0, %c2_i32 : i32
    %1 = arith.addi %0, %arg1 : i32
    %c0_i32 = arith.constant 0 : i32
    %c0_i32_0 = arith.constant 0 : i32
    return %1, %c0_i32 : i32, i32
  }
  func.func @transform_2(%arg0: i32, %arg1: i32) -> (i32, i32) {
    %c0_i32 = arith.constant 0 : i32
    %c0_i32_0 = arith.constant 0 : i32
    return %arg0, %c0_i32 : i32, i32
  }
}

</mosaic_0001>

<llo_original>
// kernel: tpu_custom_call.1
$region0: #{tpu_custom_call.1}
  #allocation0 [shape = 'u32[]', space=smem, size = 0x4, offset = 0x4, fixed_abs, tag = 'smem constant byte address 0x4 - core index']
  #allocation1 [shape = 'u32[144,128]{1,0:T(1,128)}', space=vmem, size = 0x12000, scoped, tag = 'internal scratch']
  #allocation2 [shape = 'f32[16,128]{1,0:T(8,128)}', space=vmem, size = 0x2000, scoped, tag = 'scratch operand']
  %s0 = inlined_call_operand.hbm [shape: s32[1,512], index: 0, kind: input, shape index: {}]
  %s1 = inlined_call_operand.hbm [shape: f32[512,128], index: 1, kind: input, shape index: {}]
  %s2 = inlined_call_operand.hbm [shape: f32[32,128], index: 2, kind: output, shape index: {}]
  %s3 = sld [smem:[#allocation0]]
  $region57: #{tpu_custom_call.1} parent=0
    _
  %s5 = ssub.s32 1, %s3
  %s6 = scalar_select 0, %s5, %s3
  $region1: #{tpu_custom_call.1} parent=0
    #allocation3 [shape = 'u8[1024]{0}', space=vmem, size = 0x400, scoped, tag = 'input window, operand 0']
    #allocation4 [shape = 's32[2]{0}', space=sflag, size = 0x8, scoped, tag = 'scoped memory for tpu_custom_call.1']
    #allocation5 [shape = 's32[2]{0}', space=sflag, size = 0x8, scoped, tag = 'scoped memory for tpu_custom_call.1']
    #allocation6 [shape = 'u8[131072]{0}', space=vmem, size = 0x20000, scoped, tag = 'input window, operand 1']
    #allocation7 [shape = 's32[2]{0}', space=sflag, size = 0x8, scoped, tag = 'scoped memory for tpu_custom_call.1']
    #allocation8 [shape = 'u8[16384]{0}', space=vmem, size = 0x4000, scoped, tag = 'output window, operand 0']
    %7 = vsyncpa [#allocation4], 0
    %s8 = scalar_lea.sflag [#allocation4], 1
    %9 = vsyncpa %s8, 0
    %10 = vsyncpa [#allocation7], 0
    %s11 = scalar_lea.sflag [#allocation7], 1
    %12 = vsyncpa %s11, 0
    %13 = vsyncpa [#allocation5], 0
    %s14 = scalar_lea.sflag [#allocation5], 1
    %15 = vsyncpa %s14, 0
    loop: start=0, step=1, limit=6
    $region2: #{tpu_custom_call.1} parent=1 // loop_pre_header
      _
    $region3: #{tpu_custom_call.1} parent=1 // loop_header
      %s17 = sphi 0, %s21
      %p18 = scmp.ge.s32.totalorder %s17, 6
      %s24 = sphi 0, %s36
      %s25 = sphi 0, %s32
      %s26 = sphi 0, %s24
      %s27 = sphi 0, %s25
      %s28 = sphi 0, %s26
      %s29 = sphi 0, %s27
      %s43 = sphi 0, %s45
      %s46 = sphi 0, %s43
      %s47 = sphi 0, %s46
      %s63 = sphi 0, %s47
      %s73 = sphi 0, %s75
      %s76 = sphi 0, %s73
      %s77 = sphi 0, %s76
      %s93 = sphi 0, %s77
      %s99 = sphi 0, %s101
      %s102 = sphi 0, %s99
      %s103 = sphi 0, %s102
      %s119 = sphi 0, %s103
    $region4: #{tpu_custom_call.1} parent=1 // loop_header_branch
      %20 = sbr.rel (%p18) target = $region8
    $region5: #{tpu_custom_call.1} parent=1 // loop_body
      %s22 = ssub.s32 %s17, 1
      %s23 = ssub.s32 %s17, 2
      %s30 = sadd.s32 1, %s25
      %p31 = scmp.ge.s32.totalorder %s30, 2
      %s32 = scalar_select %p31, 0, %s30
      %s33 = sadd.s32 1, %s24
      %s34 = scalar_select %p31, %s33, %s24
      %p35 = scmp.ge.s32.totalorder %s34, 2
      %s36 = scalar_select %p35, 0, %s34
      %s37 = smul.u32 %s24, 2
      %s38 = sadd.s32 %s37, %s25
      %s39 = smul.u32 %s36, 2
      %s40 = sadd.s32 %s39, %s32
      %s41 = ssub.s32 %s38, %s40
      %p42 = scmp.eq.s32.totalorder %s41, 0
      %s44 = sadd.s32 %s43, 1
      %s45 = scalar_select %p42, %s43, %s44
      %p48 = pneg %p42
      %p49 = scmp.eq.s32.totalorder %s17, 3
      %p50 = por %p48, %p49
      %p51 = scmp.ne.s32.totalorder %s43, %s46
      %p52 = scmp.eq.s32.totalorder %s17, 0
      %p53 = por %p51, %p52
      %p54 = scmp.ne.s32.totalorder %s43, %s46
      %p55 = scmp.eq.s32.totalorder %s22, 3
      %p56 = por %p54, %p55
      %p57 = scmp.ne.s32.totalorder %s46, %s47
      %p58 = scmp.eq.s32.totalorder %s22, 0
      %p59 = por %p57, %p58
      %p60 = scmp.ne.s32.totalorder %s46, %s47
      %p61 = scmp.eq.s32.totalorder %s23, 3
      %p62 = por %p60, %p61
      %p64 = scmp.ne.s32.totalorder %s47, %s63
      %p65 = scmp.eq.s32.totalorder %s23, 0
      %p66 = por %p64, %p65
      %s67 = smul.u32 %s24, 2
      %s68 = sadd.s32 %s67, %s25
      %s69 = smul.u32 %s36, 2
      %s70 = sadd.s32 %s69, %s32
      %s71 = ssub.s32 %s68, %s70
      %p72 = scmp.eq.s32.totalorder %s71, 0
      %s74 = sadd.s32 %s73, 1
      %s75 = scalar_select %p72, %s73, %s74
      %p78 = pneg %p72
      %p79 = scmp.eq.s32.totalorder %s17, 3
      %p80 = por %p78, %p79
      %p81 = scmp.ne.s32.totalorder %s73, %s76
      %p82 = scmp.eq.s32.totalorder %s17, 0
      %p83 = por %p81, %p82
      %p84 = scmp.ne.s32.totalorder %s73, %s76
      %p85 = scmp.eq.s32.totalorder %s22, 3
      %p86 = por %p84, %p85
      %p87 = scmp.ne.s32.totalorder %s76, %s77
      %p88 = scmp.eq.s32.totalorder %s22, 0
      %p89 = por %p87, %p88
      %p90 = scmp.ne.s32.totalorder %s76, %s77
      %p91 = scmp.eq.s32.totalorder %s23, 3
      %p92 = por %p90, %p91
      %p94 = scmp.ne.s32.totalorder %s77, %s93
      %p95 = scmp.eq.s32.totalorder %s23, 0
      %p96 = por %p94, %p95
      %s97 = ssub.s32 %s24, %s36
      %p98 = scmp.eq.s32.totalorder %s97, 0
      %s100 = sadd.s32 %s99, 1
      %s101 = scalar_select %p98, %s99, %s100
      %p104 = pneg %p98
      %p105 = scmp.eq.s32.totalorder %s17, 3
      %p106 = por %p104, %p105
      %p107 = scmp.ne.s32.totalorder %s99, %s102
      %p108 = scmp.eq.s32.totalorder %s17, 0
      %p109 = por %p107, %p108
      %p110 = scmp.ne.s32.totalorder %s99, %s102
      %p111 = scmp.eq.s32.totalorder %s22, 3
      %p112 = por %p110, %p111
      %p113 = scmp.ne.s32.totalorder %s102, %s103
      %p114 = scmp.eq.s32.totalorder %s22, 0
      %p115 = por %p113, %p114
      %p116 = scmp.ne.s32.totalorder %s102, %s103
      %p117 = scmp.eq.s32.totalorder %s23, 3
      %p118 = por %p116, %p117
      %p120 = scmp.ne.s32.totalorder %s103, %s119
      %p121 = scmp.eq.s32.totalorder %s23, 0
      %p122 = por %p120, %p121
      %p123 = scmp.le.s32.totalorder 1, %s17
      %p124 = scmp.lt.s32.totalorder %s17, 5
      %p125 = pnand %p123, %p124
      %p126 = pneg %p125
      // Predicated region
      $region9: #{tpu_custom_call.1} parent=5 // pred_check
        _
      $region10: #{tpu_custom_call.1} parent=5 // pred_check_branch
        %128 = sbr.rel (%p125) target = $region12
      $region11: #{tpu_custom_call.1} parent=5 // pred_region
        %s129 = ssub.s32 %s17, 1
      $region12: #{tpu_custom_call.1} parent=5 // pred_fallthru
        _
      %p130 = scmp.lt.s32.totalorder %s17, 4
      // Predicated region
      $region13: #{tpu_custom_call.1} parent=5 // pred_check
        %p131 = pneg %p130
      $region14: #{tpu_custom_call.1} parent=5 // pred_check_branch
        %133 = sbr.rel (%p131) target = $region16
      $region15: #{tpu_custom_call.1} parent=5 // pred_region
        // Predicated region
        $region17: #{tpu_custom_call.1} parent=15 // pred_check
          %p134 = pneg %p53
        $region18: #{tpu_custom_call.1} parent=15 // pred_check_branch
          %136 = sbr.rel (%p134) target = $region20
        $region19: #{tpu_custom_call.1} parent=15 // pred_region
          %s137 = sand.u32 %s43, 1
          %s138 = scalar_lea.sflag [#allocation4], %s137
          %s139 = sand.u32 %s43, 1
          %s140 = scalar_lea.vmem [#allocation3], %s139
          %s141 = smul.u32 %s24, 2
          %s142 = sadd.s32 %s141, %s25
          %s144 = ssub.s32 16, 16
          %145 = vsyncadd %s138, %s144
          %s146 = smul.addr %s142, 16
          %s147 = scalar_lea.hbm %s0, %s146
          %s149 = sshll.u32 %s140, 4
          %s150 = int_to_ptr.vmem [resolvable:$true] %s149
          %152 = dma.hbm_to_vmem [thread:$0]  %s147, 16, %s150, %s138
        $region20: #{tpu_custom_call.1} parent=15 // pred_fallthru
          _
        // Predicated region
        $region21: #{tpu_custom_call.1} parent=15 // pred_check
          %p153 = pneg %p83
        $region22: #{tpu_custom_call.1} parent=15 // pred_check_branch
          %155 = sbr.rel (%p153) target = $region24
        $region23: #{tpu_custom_call.1} parent=15 // pred_region
          %s156 = sand.u32 %s73, 1
          %s157 = scalar_lea.sflag [#allocation7], %s156
          %s158 = sand.u32 %s73, 1
          %s159 = smul.addr %s158, 128
          %s160 = scalar_lea.vmem [#allocation6], %s159
          %s161 = smul.u32 %s24, 2
          %s162 = sadd.s32 %s161, %s25
          %s163 = smul.u32 16, %s162
          %s165 = ssub.s32 2048, 2048
          %166 = vsyncadd %s157, %s165
          %s167 = smul.addr %s163, 128
          %s168 = scalar_lea.hbm %s1, %s167
          %s169 = sshll.u32 %s160, 4
          %s170 = int_to_ptr.vmem [resolvable:$true] %s169
          %175 = dma.hbm_to_vmem [thread:$0]  %s168, 2048, %s170, %s157, 128, 128, 8
        $region24: #{tpu_custom_call.1} parent=15 // pred_fallthru
          _
      $region16: #{tpu_custom_call.1} parent=5 // pred_fallthru
        _
      %p176 = scmp.le.s32.totalorder 1, %s17
      %p177 = scmp.lt.s32.totalorder %s17, 5
      %p178 = pnand %p176, %p177
      %p179 = pneg %p178
      // Predicated region
      $region25: #{tpu_custom_call.1} parent=5 // pred_check
        _
      $region26: #{tpu_custom_call.1} parent=5 // pred_check_branch
        %181 = sbr.rel (%p178) target = $region28
      $region27: #{tpu_custom_call.1} parent=5 // pred_region
        %s182 = ssub.s32 %s17, 1
        %s183 = sand.u32 %s46, 1
        %s184 = scalar_lea.sflag [#allocation4], %s183
        %s185 = sand.u32 %s46, 1
        %s186 = scalar_lea.vmem [#allocation3], %s185
        // Predicated region
        $region29: #{tpu_custom_call.1} parent=27 // pred_check
          %p187 = pneg %p59
        $region30: #{tpu_custom_call.1} parent=27 // pred_check_branch
          %189 = sbr.rel (%p187) target = $region32
        $region31: #{tpu_custom_call.1} parent=27 // pred_region
          %190 = dma.done %s184, 16
        $region32: #{tpu_custom_call.1} parent=27 // pred_fallthru
          _
        %s191 = sand.u32 %s76, 1
        %s192 = scalar_lea.sflag [#allocation7], %s191
        %s193 = sand.u32 %s76, 1
        %s194 = smul.addr %s193, 128
        %s195 = scalar_lea.vmem [#allocation6], %s194
        // Predicated region
        $region33: #{tpu_custom_call.1} parent=27 // pred_check
          %p196 = pneg %p89
        $region34: #{tpu_custom_call.1} parent=27 // pred_check_branch
          %198 = sbr.rel (%p196) target = $region36
        $region35: #{tpu_custom_call.1} parent=27 // pred_region
          %199 = dma.done %s192, 2048
        $region36: #{tpu_custom_call.1} parent=27 // pred_fallthru
          _
        %s200 = sand.u32 %s46, 1
        %s201 = scalar_lea.sflag [#allocation4], %s200
        %s202 = sand.u32 %s46, 1
        %s203 = scalar_lea.vmem [#allocation3], %s202
        %p204 = pneg %p59
        %p205 = pneg %p56
        %s206 = sand.u32 %s76, 1
        %s207 = scalar_lea.sflag [#allocation7], %s206
        %s208 = sand.u32 %s76, 1
        %s209 = smul.addr %s208, 128
        %s210 = scalar_lea.vmem [#allocation6], %s209
        %p211 = pneg %p89
        %p212 = pneg %p86
        %p213 = pneg %p115
        %p214 = pneg %p112
        %s215 = sand.u32 %s102, 1
        %s216 = scalar_lea.sflag [#allocation5], %s215
        %s217 = sand.u32 %s102, 1
        %s218 = smul.addr %s217, 16
        %s219 = scalar_lea.vmem [#allocation8], %s218
        %s220 = smul.u32 %s26, 2
        %s221 = sadd.s32 %s220, %s27
        %s222 = smul.u32 %s26, 2
        %s223 = sadd.s32 %s222, %s27
        %s224 = smul.u32 16, %s223
        %s225 = smul.u32 2, %s26
        %p226 = scmp.eq.s32.totalorder %s27, 0
        // Predicated region
        $region37: #{tpu_custom_call.1} parent=27 // pred_check
          %p227 = pneg %p226
        $region38: #{tpu_custom_call.1} parent=27 // pred_check_branch
          %229 = sbr.rel (%p227) target = $region40
        $region39: #{tpu_custom_call.1} parent=27 // pred_region
          %230 = vst [vmem:[#allocation2] sm:$0xff] 0.0
          %231 = vst [vmem:[#allocation2 + $0x8] sm:$0xff] 0.0
        $region40: #{tpu_custom_call.1} parent=27 // pred_fallthru
          _
        %v232 = vlaneseq
        %v233 = vshrl.u32 %v232, 7
        %v234 = vadd.s32 %v233, 8
        %v235 = vld [vmem:[%s186] sm:$0x1]
        %v236 = vlaneseq
        %v237 = vshrl.u32 %v236, 7
        %v238 = vsub.s32 0, %v237
        %v239 = vrot.slane %v235, %v238
        %vm240 = vcmp.eq.s32.totalorder %v233, %v239
        %vm241 = vcmp.eq.s32.totalorder %v234, %v239
        %v242 = vsel %vm240, 1, 0
        %v243 = vsel %vm241, 1, 0
        %v244 = vcvt.s32.f32 %v242
        %v245 = vcvt.s32.f32 %v243
        %v246 = vld [vmem:[#allocation2] sm:$0xff]
        %v247 = vld [vmem:[#allocation2 + $0x8] sm:$0xff]
        %v248 = vld [vmem:[%s195] sm:$0xff]
        %v249 = vld [vmem:[%s195 + $0x8] sm:$0xff]
        %v250 = vld [vmem:[%s195 + $0x10] sm:$0xff]
        %v251 = vld [vmem:[%s195 + $0x18] sm:$0xff]
        %v252 = vld [vmem:[%s195 + $0x20] sm:$0xff]
        %v253 = vld [vmem:[%s195 + $0x28] sm:$0xff]
        %v254 = vld [vmem:[%s195 + $0x30] sm:$0xff]
        %v255 = vld [vmem:[%s195 + $0x38] sm:$0xff]
        %v256 = vld [vmem:[%s195 + $0x40] sm:$0xff]
        %v257 = vld [vmem:[%s195 + $0x48] sm:$0xff]
        %v258 = vld [vmem:[%s195 + $0x50] sm:$0xff]
        %v259 = vld [vmem:[%s195 + $0x58] sm:$0xff]
        %v260 = vld [vmem:[%s195 + $0x60] sm:$0xff]
        %v261 = vld [vmem:[%s195 + $0x68] sm:$0xff]
        %v262 = vld [vmem:[%s195 + $0x70] sm:$0xff]
        %v263 = vld [vmem:[%s195 + $0x78] sm:$0xff]
        %264 = vmatprep.subr.mxu0 0.0
        %265 = vmatpush1.msra.mxu0 %v248
        %266 = vmatprep.subr.mxu0 0.0
        %267 = vmatpush1.msra.mxu0 %v249
        %268 = vmatprep.subr.mxu0 0.0
        %269 = vmatpush1.msra.mxu0 %v250
        %270 = vmatprep.subr.mxu0 0.0
        %271 = vmatpush1.msra.mxu0 %v251
        %272 = vmatprep.subr.mxu0 0.0
        %273 = vmatpush1.msra.mxu0 %v252
        %274 = vmatprep.subr.mxu0 0.0
        %275 = vmatpush1.msra.mxu0 %v253
        %276 = vmatprep.subr.mxu0 0.0
        %277 = vmatpush1.msra.mxu0 %v254
        %278 = vmatprep.subr.mxu0 0.0
        %279 = vmatpush1.msra.mxu0 %v255
        %280 = vmatprep.subr.mxu0 0.0
        %281 = vmatpush1.msra.mxu0 %v256
        %282 = vmatprep.subr.mxu0 0.0
        %283 = vmatpush1.msra.mxu0 %v257
        %284 = vmatprep.subr.mxu0 0.0
        %285 = vmatpush1.msra.mxu0 %v258
        %286 = vmatprep.subr.mxu0 0.0
        %287 = vmatpush1.msra.mxu0 %v259
        %288 = vmatprep.subr.mxu0 0.0
        %289 = vmatpush1.msra.mxu0 %v260
        %290 = vmatprep.subr.mxu0 0.0
        %291 = vmatpush1.msra.mxu0 %v261
        %292 = vmatprep.subr.mxu0 0.0
        %293 = vmatpush1.msra.mxu0 %v262
        %294 = vmatprep.subr.mxu0 0.0
        %295 = vmatpush1.msra.mxu0 %v263
        %296 = vmatprep.subr.mxu0 0.0
        %297 = vmatpush1.msra.mxu0 0.0
        %298 = vmatprep.subr.mxu0 0.0
        %299 = vmatpush1.msra.mxu0 0.0
        %300 = vmatprep.subr.mxu0 0.0
        %301 = vmatpush1.msra.mxu0 0.0
        %302 = vmatprep.subr.mxu0 0.0
        %303 = vmatpush1.msra.mxu0 0.0
        %304 = vmatprep.subr.mxu0 0.0
        %305 = vmatpush1.msra.mxu0 0.0
        %306 = vmatprep.subr.mxu0 0.0
        %307 = vmatpush1.msra.mxu0 0.0
        %308 = vmatprep.subr.mxu0 0.0
        %309 = vmatpush1.msra.mxu0 0.0
        %310 = vmatprep.subr.mxu0 0.0
        %311 = vmatpush1.msra.mxu0 0.0
        %312 = vmatprep.subr.mxu0 0.0
        %313 = vmatpush1.msra.mxu0 0.0
        %314 = vmatprep.subr.mxu0 0.0
        %315 = vmatpush1.msra.mxu0 0.0
        %316 = vmatprep.subr.mxu0 0.0
        %317 = vmatpush1.msra.mxu0 0.0
        %318 = vmatprep.subr.mxu0 0.0
        %319 = vmatpush1.msra.mxu0 0.0
        %320 = vmatprep.subr.mxu0 0.0
        %321 = vmatpush1.msra.mxu0 0.0
        %322 = vmatprep.subr.mxu0 0.0
        %323 = vmatpush1.msra.mxu0 0.0
        %324 = vmatprep.subr.mxu0 0.0
        %325 = vmatpush1.msra.mxu0 0.0
        %326 = vmatprep.subr.mxu0 0.0
        %327 = vmatpush1.msra.mxu0 0.0
        %328 = vmatprep.mubr.f32.mxu0 0.0
        %329 = vmatmul.mubr.f32.gmra.mrb[0].mxu0 %v244
        %v330 = vpop.f32.mrb[0].mxu0
        %v331 = vadd.f32 0.0, %v330
        %v332 = vpop.f32.mrb[0].mxu0
        %333 = vmatprep.mubr.f32.mxu0 0.0
        %334 = vmatmul.mubr.f32.gmra.mrb[0].mxu0 %v245
        %v335 = vpop.f32.mrb[0].mxu0
        %v336 = vadd.f32 0.0, %v335
        %v337 = vpop.f32.mrb[0].mxu0
        %338 = vdwg.mxu0
        %v339 = vadd.f32 %v246, %v331
        %v340 = vadd.f32 %v247, %v336
        %341 = vst [vmem:[#allocation2] sm:$0xff] %v339
        %342 = vst [vmem:[#allocation2 + $0x8] sm:$0xff] %v340
        %p343 = scmp.eq.s32.totalorder %s27, 1
        // Predicated region
        $region41: #{tpu_custom_call.1} parent=27 // pred_check
          %p344 = pneg %p343
        $region42: #{tpu_custom_call.1} parent=27 // pred_check_branch
          %346 = sbr.rel (%p344) target = $region44
        $region43: #{tpu_custom_call.1} parent=27 // pred_region
          %v347 = vld [vmem:[#allocation2] sm:$0xff]
          %v348 = vld [vmem:[#allocation2 + $0x8] sm:$0xff]
          %vm349 = vcmp.eq.f32.partialorder %v347, 0.0
          %vm350 = vcmp.eq.f32.partialorder %v348, 0.0
          %v351 = vsel %vm349, 1e-12, %v347
          %v352 = vsel %vm350, 1e-12, %v348
          %354 = vset.pattern.permute.xlu0 16
          %355 = vperm.xlu0 %354, %v351
          %v356 = vpop.permute.xlu0 %355
          %359 = vset.pattern.permute.xlu0 16
          %360 = vperm.xlu0 %359, %v352
          %v361 = vpop.permute.xlu0 %360
          %v363 = vrcp.pop %v356
          %v364 = vmul.f32 %v347, %v363
          %v365 = vrcp.pop %v361
          %v366 = vmul.f32 %v348, %v365
          %vm367 = vcmp.gt.f32.partialorder %v364, 0.0
          %vm368 = vcmp.gt.f32.partialorder %v366, 0.0
          %v369 = vmul.f32 %v364, 1.442695
          %v370 = vpow.pop %v369
          %v371 = vmul.f32 %v366, 1.442695
          %v372 = vpow.pop %v371
          %v373 = vsub.f32 %v370, 1.0
          %v374 = vsub.f32 %v372, 1.0
          %v375 = vsel %vm367, %v364, %v373
          %v376 = vsel %vm368, %v366, %v374
          %377 = vst [vmem:[%s219] sm:$0xff] %v375
          %378 = vst [vmem:[%s219 + $0x8] sm:$0xff] %v376
        $region44: #{tpu_custom_call.1} parent=27 // pred_fallthru
          _
        %s379 = sand.u32 %s102, 1
        %s380 = scalar_lea.sflag [#allocation5], %s379
        %s381 = sand.u32 %s102, 1
        %s382 = smul.addr %s381, 16
        %s383 = scalar_lea.vmem [#allocation8], %s382
        // Predicated region
        $region45: #{tpu_custom_call.1} parent=27 // pred_check
          %p384 = pneg %p112
        $region46: #{tpu_custom_call.1} parent=27 // pred_check_branch
          %386 = sbr.rel (%p384) target = $region48
        $region47: #{tpu_custom_call.1} parent=27 // pred_region
          %s387 = smul.u32 2, %s26
          %s389 = ssub.s32 256, 256
          %390 = vsyncadd %s380, %s389
          %s391 = smul.addr %s387, 128
          %s392 = scalar_lea.hbm %s2, %s391
          %s393 = sshll.u32 %s383, 4
          %s394 = int_to_ptr.vmem [resolvable:$true] %s393
          %399 = dma.vmem_to_hbm [thread:$0]  %s394, 256, %s392, %s380, 128, 128, 8
        $region48: #{tpu_custom_call.1} parent=27 // pred_fallthru
          _
      $region28: #{tpu_custom_call.1} parent=5 // pred_fallthru
        _
      %p400 = scmp.le.s32.totalorder 2, %s17
      // Predicated region
      $region49: #{tpu_custom_call.1} parent=5 // pred_check
        %p401 = pneg %p400
      $region50: #{tpu_custom_call.1} parent=5 // pred_check_branch
        %403 = sbr.rel (%p401) target = $region52
      $region51: #{tpu_custom_call.1} parent=5 // pred_region
        %s404 = ssub.s32 %s17, 2
        // Predicated region
        $region53: #{tpu_custom_call.1} parent=51 // pred_check
          %p405 = pneg %p118
        $region54: #{tpu_custom_call.1} parent=51 // pred_check_branch
          %407 = sbr.rel (%p405) target = $region56
        $region55: #{tpu_custom_call.1} parent=51 // pred_region
          %s408 = sand.u32 %s103, 1
          %s409 = scalar_lea.sflag [#allocation5], %s408
          %s410 = sand.u32 %s103, 1
          %s411 = smul.addr %s410, 16
          %s412 = scalar_lea.vmem [#allocation8], %s411
          %413 = dma.done %s409, 256
        $region56: #{tpu_custom_call.1} parent=51 // pred_fallthru
          _
      $region52: #{tpu_custom_call.1} parent=5 // pred_fallthru
        _
    $region6: #{tpu_custom_call.1} parent=1 // loop_footer
      %s21 = sadd.s32 1, %s17
    $region7: #{tpu_custom_call.1} parent=1 // loop_footer_branch
      %16 = sbr.rel target = $region3
    $region8: #{tpu_custom_call.1} parent=1 // loop_exit
      _
    %414 = vsyncpa [#allocation4], 1
    %s415 = scalar_lea.sflag [#allocation4], 1
    %416 = vsyncpa %s415, 1
    %417 = vsyncpa [#allocation7], 1
    %s418 = scalar_lea.sflag [#allocation7], 1
    %419 = vsyncpa %s418, 1
    %420 = vsyncpa [#allocation5], 1
    %s421 = scalar_lea.sflag [#allocation5], 1
    %422 = vsyncpa %s421, 1

</llo_original>
